<compile_context>
chip_gen: v6e
topology: v6e:2x2x1
jax: 0.10.0
libtpu: 0.0.40
codegen_flags: <defaults>
</compile_context>

<pallas_src>
import functools

import jax
import jax.numpy as jnp
from jax.experimental import pallas as pl
from jax.experimental.pallas import tpu as pltpu


def _round_up(n, m):
    return ((n + m - 1) // m) * m


# ----------------------------------------------------------------------------
# Kernel: one row-tile -> lane-packed partial sums.
#   out[0, 0, 0] = sum_rows w * mean_s BCEwithLogits(x, t)
#   out[0, 0, 1] = sum_rows w * (1 - (2*<p,t>+1)/(sum p + sum t + 1))
#   out[0, 0, 2] = sum_rows w * [shared argmax position of x and t]
#   out[0, 0, 3] = sum_rows w
# ----------------------------------------------------------------------------
def _pos_set_loss_kernel(x_ref, t_ref, w_ref, out_ref,
                         *, rows_total, tile_rows, inv_hw):
    i = pl.program_id(0)

    xn = x_ref[...]                                  # (TR, S) native dtype
    tn = t_ref[...]                                  # (TR, S) native dtype
    w = w_ref[...].astype(jnp.float32)               # (TR, 1)

    # ---- top1 accuracy: shared-argmax-position test (native dtype) ----------
    # Equivalent to argmax(x) == argmax(t) except on exact float ties.
    xmax = jnp.max(xn, axis=-1, keepdims=True)
    tmax = jnp.max(tn, axis=-1, keepdims=True)
    hit = ((xn >= xmax) & (tn >= tmax)).astype(jnp.float32)
    top1_row = jnp.max(hit, axis=-1, keepdims=True)  # (TR, 1) in {0, 1}

    # ---- BCE-with-logits + dice (f32) ---------------------------------------
    x = xn.astype(jnp.float32)
    t = tn.astype(jnp.float32)
    # sigmoid via tanh: one EUP op instead of exp + reciprocal
    p = 0.5 * jnp.tanh(0.5 * x) + 0.5
    # log1p(exp(-|x|)) == -log(where(x >= 0, p, 1 - p)); argument is in [0.5, 1)
    log_term = -jnp.log(jnp.where(x >= 0.0, p, 1.0 - p))
    bce = jnp.maximum(x, 0.0) - x * t + log_term

    bce_row = jnp.sum(bce, axis=-1, keepdims=True) * inv_hw     # spatial mean
    inter = jnp.sum(p * t, axis=-1, keepdims=True)
    denom = jnp.sum(p + t, axis=-1, keepdims=True)               # sum p + sum t
    dice_row = 1.0 - (2.0 * inter + 1.0) / (denom + 1.0)

    # ---- mask padded rows of the (possibly ragged) last tile ----------------
    row = jax.lax.broadcasted_iota(jnp.int32, (tile_rows, 1), 0) + i * tile_rows
    valid = row < rows_total
    wm = jnp.where(valid, w, 0.0)
    # padded rows hold garbage and may yield NaN/Inf -> sanitize before * wm
    bce_row = jnp.where(valid, bce_row, 0.0)
    dice_row = jnp.where(valid, dice_row, 0.0)

    bce_s = jnp.sum(wm * bce_row, axis=0, keepdims=True)         # (1, 1)
    dice_s = jnp.sum(wm * dice_row, axis=0, keepdims=True)
    top1_s = jnp.sum(wm * top1_row, axis=0, keepdims=True)
    wsum_s = jnp.sum(wm, axis=0, keepdims=True)

    # ---- pack the 4 partial sums into lanes 0..3 of sublane 0 ---------------
    lane = jax.lax.broadcasted_iota(jnp.int32, (8, 128), 1)
    sub = jax.lax.broadcasted_iota(jnp.int32, (8, 128), 0)
    packed = jnp.where((sub == 0) & (lane == 0), bce_s,
             jnp.where((sub == 0) & (lane == 1), dice_s,
             jnp.where((sub == 0) & (lane == 2), top1_s,
             jnp.where((sub == 0) & (lane == 3), wsum_s, 0.0))))
    out_ref[0] = packed


def _vmem_budget():
    """(vmem_limit_bytes, per-tile input+temp budget) derived from the chip."""
    try:
        cap = int(pltpu.get_tpu_info().vmem_capacity_bytes)
    except Exception:  # pragma: no cover - conservative fallback
        cap = 64 * 1024 * 1024
    vmem_limit = min(cap * 3 // 4, 96 * 1024 * 1024)   # v7x: 48 MiB, v5e/v6e: 96 MiB
    return vmem_limit, vmem_limit // 2


def _choose_tile_rows(bk, hw, x_dtype, t_dtype, tile_budget):
    """Row-tile size so (2 inputs x 2 buffers) + ~6 f32 temporaries fit."""
    s_pad = _round_up(hw, 128)                        # lane padding in VMEM
    n_buf = 2                                         # double-buffered pipeline
    n_f32_temps = 6                                   # p, bce, selects, upcasts...
    in_item = jnp.dtype(x_dtype).itemsize + jnp.dtype(t_dtype).itemsize
    bytes_per_row = (n_buf * in_item + n_f32_temps * 4) * s_pad
    sublane = {1: 32, 2: 16, 4: 8}.get(jnp.dtype(x_dtype).itemsize, 8)
    max_tr = max(sublane, (tile_budget // max(bytes_per_row, 1)) // sublane * sublane)
    if bk <= max_tr:
        return bk, 1                                  # single full-extent block
    return max_tr, pl.cdiv(bk, max_tr)


def _pos_set_loss_sums(x2d, t2d, w2d):
    """x2d, t2d: (R, S) heatmaps (native dtype); w2d: (R, 1) f32 weights."""
    bk, hw = x2d.shape
    vmem_limit, tile_budget = _vmem_budget()
    tr, n_tiles = _choose_tile_rows(bk, hw, x2d.dtype, t2d.dtype, tile_budget)

    kernel = functools.partial(_pos_set_loss_kernel,
                               rows_total=bk, tile_rows=tr,
                               inv_hw=1.0 / float(hw))

    in_item = x2d.dtype.itemsize + t2d.dtype.itemsize
    cost = pl.CostEstimate(
        flops=int(14 * bk * hw),
        transcendentals=int(2 * bk * hw),
        bytes_accessed=int(in_item * bk * hw + 4 * bk + 4 * 1024 * n_tiles),
    )

    parts = pl.pallas_call(
        kernel,
        out_shape=jax.ShapeDtypeStruct((n_tiles, 8, 128), jnp.float32),
        grid=(n_tiles,),
        in_specs=[
            pl.BlockSpec((tr, hw), lambda i: (i, 0)),
            pl.BlockSpec((tr, hw), lambda i: (i, 0)),
            pl.BlockSpec((tr, 1), lambda i: (i, 0)),
        ],
        out_specs=pl.BlockSpec((1, 8, 128), lambda i: (i, 0, 0)),
        compiler_params=pltpu.CompilerParams(
            dimension_semantics=("parallel",),        # megacore-shardable on v7x
            vmem_limit_bytes=int(vmem_limit)),
        cost_estimate=cost,
    )(x2d, t2d, w2d)

    totals = jnp.sum(parts[:, 0, :4], axis=0)         # tiny XLA reduce
    return totals[0], totals[1], totals[2], totals[3]


# ----------------------------------------------------------------------------
# POSDiceLoss forward (functional).
#   pred_logits:    (B, K, H, W)  predicted keypoint-heatmap logits   (NCHW)
#   target_heatmap: (B, K, H, W)  ground-truth gaussian heatmaps in [0, 1]
#   target_weight:  (B, K, 1)     per-keypoint visibility / weight
# Returns dict with keys 'loss_bce_pos', 'loss_mask_pos', 'loss_top1_accuracy'
# already multiplied by weight_dict (class_weight, mask_weight, 1).
# ----------------------------------------------------------------------------
@functools.partial(jax.jit, static_argnames=("class_weight", "mask_weight"))
def pos_dice_loss(pred_logits, target_heatmap, target_weight,
                  class_weight=1.0, mask_weight=1.0):
    b, k, h, w = pred_logits.shape
    bk, hw = b * k, h * w

    # keep native dtypes; reshape is a layout-free collapse of contiguous dims
    x2d = pred_logits.reshape(bk, hw)
    t2d = target_heatmap.reshape(bk, hw)
    w2d = target_weight.reshape(bk, 1).astype(jnp.float32)   # tiny

    bce_w, dice_w, top1_w, wsum = _pos_set_loss_sums(x2d, t2d, w2d)

    num = jnp.maximum(wsum, 1.0)
    loss_bce = bce_w / num
    loss_dice = dice_w / num
    top1 = top1_w / num

    return {
        "loss_bce_pos": class_weight * loss_bce,
        "loss_mask_pos": mask_weight * loss_dice,
        "loss_top1_accuracy": 1.0 * top1,
    }


if __name__ == "__main__":
    key = jax.random.PRNGKey(0)
    k_pred, k_tgt = jax.random.split(key)

    B, K, H, W = 2, 4, 16, 16  # small pose setup: 4 keypoints, 16x16 heatmaps

    pred_logits = jax.random.normal(k_pred, (B, K, H, W), dtype=jnp.float32)
    # synthetic gaussian-like target heatmaps in [0, 1]
    yy = jnp.arange(H, dtype=jnp.float32)[None, None, :, None]
    xx = jnp.arange(W, dtype=jnp.float32)[None, None, None, :]
    centers = jax.random.uniform(k_tgt, (2, B, K, 1, 1),
                                 minval=3.0, maxval=12.0)
    target_heatmap = jnp.exp(-((yy - centers[0]) ** 2 +
                               (xx - centers[1]) ** 2) / (2.0 * 2.0 ** 2))
    target_weight = jnp.ones((B, K, 1), dtype=jnp.float32)

    losses = pos_dice_loss(pred_logits, target_heatmap, target_weight,
                           class_weight=2.0, mask_weight=5.0)
    jax.block_until_ready(losses)

    for name, val in losses.items():
        assert jnp.isfinite(val), name
    print("KERNEL_OK")
</pallas_src>

<mosaic_0001>
module attributes {stable_mosaic.version = 11 : i64} {
  func.func @_pos_set_loss_kernel(%arg0: i32, %arg1: memref<8x256xf32, #tpu.memory_space<vmem>>, %arg2: memref<8x256xf32, #tpu.memory_space<vmem>>, %arg3: memref<8x1xf32, #tpu.memory_space<vmem>>, %arg4: memref<1x8x128xf32, #tpu.memory_space<vmem>>) attributes {dimension_semantics = [#tpu.dimension_semantics<parallel>], iteration_bounds = array<i64: 1>, scalar_prefetch = 0 : i64, scratch_operands = 0 : i64, tpu.core_type = #tpu.core_type<tc>, window_params = [{transform_indices = @transform_0, window_bounds = array<i64: 8, 256>}, {transform_indices = @transform_1, window_bounds = array<i64: 8, 256>}, {transform_indices = @transform_2, window_bounds = array<i64: 8, 1>}, {transform_indices = @transform_3, window_bounds = array<i64: 1, 8, 128>}]} {
    %c0 = arith.constant 0 : index
    %c0_0 = arith.constant 0 : index
    %0 = vector.load %arg1[%c0, %c0_0] : memref<8x256xf32, #tpu.memory_space<vmem>>, vector<8x256xf32>
    %c0_1 = arith.constant 0 : index
    %c0_2 = arith.constant 0 : index
    %1 = vector.load %arg2[%c0_1, %c0_2] : memref<8x256xf32, #tpu.memory_space<vmem>>, vector<8x256xf32>
    %c0_3 = arith.constant 0 : index
    %c0_4 = arith.constant 0 : index
    %2 = vector.load %arg3[%c0_3, %c0_4] : memref<8x1xf32, #tpu.memory_space<vmem>>, vector<8x1xf32>
    %cst = arith.constant dense<0xFF800000> : vector<8xf32>
    %3 = vector.multi_reduction <maximumf>, %0, %cst [1] : vector<8x256xf32> to vector<8xf32>
    %4 = vector.shape_cast %3 : vector<8xf32> to vector<8x1xf32>
    %cst_5 = arith.constant dense<0xFF800000> : vector<8xf32>
    %5 = vector.multi_reduction <maximumf>, %1, %cst_5 [1] : vector<8x256xf32> to vector<8xf32>
    %6 = vector.shape_cast %5 : vector<8xf32> to vector<8x1xf32>
    %7 = vector.broadcast %4 : vector<8x1xf32> to vector<8x256xf32>
    %8 = arith.cmpf oge, %0, %7 : vector<8x256xf32>
    %9 = vector.broadcast %6 : vector<8x1xf32> to vector<8x256xf32>
    %10 = arith.cmpf oge, %1, %9 : vector<8x256xf32>
    %11 = arith.andi %8, %10 : vector<8x256xi1>
    %12 = arith.extui %11 : vector<8x256xi1> to vector<8x256xi32>
    %13 = arith.sitofp %12 : vector<8x256xi32> to vector<8x256xf32>
    %cst_6 = arith.constant dense<0xFF800000> : vector<8xf32>
    %14 = vector.multi_reduction <maximumf>, %13, %cst_6 [1] : vector<8x256xf32> to vector<8xf32>
    %15 = vector.shape_cast %14 : vector<8xf32> to vector<8x1xf32>
    %cst_7 = arith.constant 5.000000e-01 : f32
    %16 = vector.broadcast %cst_7 : f32 to vector<8x256xf32>
    %17 = arith.mulf %16, %0 : vector<8x256xf32>
    %18 = math.tanh %17 : vector<8x256xf32>
    %cst_8 = arith.constant 5.000000e-01 : f32
    %19 = vector.broadcast %cst_8 : f32 to vector<8x256xf32>
    %20 = arith.mulf %19, %18 : vector<8x256xf32>
    %cst_9 = arith.constant 5.000000e-01 : f32
    %21 = vector.broadcast %cst_9 : f32 to vector<8x256xf32>
    %22 = arith.addf %20, %21 : vector<8x256xf32>
    %cst_10 = arith.constant 0.000000e+00 : f32
    %23 = vector.broadcast %cst_10 : f32 to vector<8x256xf32>
    %24 = arith.cmpf oge, %0, %23 : vector<8x256xf32>
    %cst_11 = arith.constant 1.000000e+00 : f32
    %25 = vector.broadcast %cst_11 : f32 to vector<8x256xf32>
    %26 = arith.subf %25, %22 : vector<8x256xf32>
    %27 = arith.select %24, %22, %26 : vector<8x256xi1>, vector<8x256xf32>
    %28 = math.log %27 : vector<8x256xf32>
    %cst_12 = arith.constant 0.000000e+00 : f32
    %29 = vector.broadcast %cst_12 : f32 to vector<8x256xf32>
    %30 = arith.subf %29, %28 : vector<8x256xf32>
    %cst_13 = arith.constant 0.000000e+00 : f32
    %31 = vector.broadcast %cst_13 : f32 to vector<8x256xf32>
    %32 = arith.maximumf %0, %31 : vector<8x256xf32>
    %33 = arith.mulf %0, %1 : vector<8x256xf32>
    %34 = arith.subf %32, %33 : vector<8x256xf32>
    %35 = arith.addf %34, %30 : vector<8x256xf32>
    %cst_14 = arith.constant dense<0.000000e+00> : vector<8xf32>
    %36 = vector.multi_reduction <add>, %35, %cst_14 [1] : vector<8x256xf32> to vector<8xf32>
    %37 = vector.shape_cast %36 : vector<8xf32> to vector<8x1xf32>
    %cst_15 = arith.constant 3.906250e-03 : f32
    %38 = vector.broadcast %cst_15 : f32 to vector<8x1xf32>
    %39 = arith.mulf %37, %38 : vector<8x1xf32>
    %40 = arith.mulf %22, %1 : vector<8x256xf32>
    %cst_16 = arith.constant dense<0.000000e+00> : vector<8xf32>
    %41 = vector.multi_reduction <add>, %40, %cst_16 [1] : vector<8x256xf32> to vector<8xf32>
    %42 = vector.shape_cast %41 : vector<8xf32> to vector<8x1xf32>
    %43 = arith.addf %22, %1 : vector<8x256xf32>
    %cst_17 = arith.constant dense<0.000000e+00> : vector<8xf32>
    %44 = vector.multi_reduction <add>, %43, %cst_17 [1] : vector<8x256xf32> to vector<8xf32>
    %45 = vector.shape_cast %44 : vector<8xf32> to vector<8x1xf32>
    %cst_18 = arith.constant 2.000000e+00 : f32
    %46 = vector.broadcast %cst_18 : f32 to vector<8x1xf32>
    %47 = arith.mulf %46, %42 : vector<8x1xf32>
    %cst_19 = arith.constant 1.000000e+00 : f32
    %48 = vector.broadcast %cst_19 : f32 to vector<8x1xf32>
    %49 = arith.addf %47, %48 : vector<8x1xf32>
    %cst_20 = arith.constant 1.000000e+00 : f32
    %50 = vector.broadcast %cst_20 : f32 to vector<8x1xf32>
    %51 = arith.addf %45, %50 : vector<8x1xf32>
    %52 = arith.divf %49, %51 : vector<8x1xf32>
    %cst_21 = arith.constant 1.000000e+00 : f32
    %53 = vector.broadcast %cst_21 : f32 to vector<8x1xf32>
    %54 = arith.subf %53, %52 : vector<8x1xf32>
    %55 = tpu.iota {dimensions = array<i32: 0>} : vector<8x1xi32>
    %c8_i32 = arith.constant 8 : i32
    %56 = arith.muli %arg0, %c8_i32 : i32
    %57 = vector.broadcast %56 : i32 to vector<8x1xi32>
    %58 = arith.addi %55, %57 : vector<8x1xi32>
    %c8_i32_22 = arith.constant 8 : i32
    %59 = vector.broadcast %c8_i32_22 : i32 to vector<8x1xi32>
    %60 = arith.cmpi slt, %58, %59 : vector<8x1xi32>
    %cst_23 = arith.constant 0.000000e+00 : f32
    %61 = vector.broadcast %cst_23 : f32 to vector<8x1xf32>
    %62 = arith.select %60, %2, %61 : vector<8x1xi1>, vector<8x1xf32>
    %cst_24 = arith.constant 0.000000e+00 : f32
    %63 = vector.broadcast %cst_24 : f32 to vector<8x1xf32>
    %64 = arith.select %60, %39, %63 : vector<8x1xi1>, vector<8x1xf32>
    %cst_25 = arith.constant 0.000000e+00 : f32
    %65 = vector.broadcast %cst_25 : f32 to vector<8x1xf32>
    %66 = arith.select %60, %54, %65 : vector<8x1xi1>, vector<8x1xf32>
    %67 = arith.mulf %62, %64 : vector<8x1xf32>
    %cst_26 = arith.constant dense<0.000000e+00> : vector<1xf32>
    %68 = vector.multi_reduction <add>, %67, %cst_26 [0] : vector<8x1xf32> to vector<1xf32>
    %69 = vector.shape_cast %68 : vector<1xf32> to vector<1x1xf32>
    %70 = arith.mulf %62, %66 : vector<8x1xf32>
    %cst_27 = arith.constant dense<0.000000e+00> : vector<1xf32>
    %71 = vector.multi_reduction <add>, %70, %cst_27 [0] : vector<8x1xf32> to vector<1xf32>
    %72 = vector.shape_cast %71 : vector<1xf32> to vector<1x1xf32>
    %73 = arith.mulf %62, %15 : vector<8x1xf32>
    %cst_28 = arith.constant dense<0.000000e+00> : vector<1xf32>
    %74 = vector.multi_reduction <add>, %73, %cst_28 [0] : vector<8x1xf32> to vector<1xf32>
    %75 = vector.shape_cast %74 : vector<1xf32> to vector<1x1xf32>
    %cst_29 = arith.constant dense<0.000000e+00> : vector<1xf32>
    %76 = vector.multi_reduction <add>, %62, %cst_29 [0] : vector<8x1xf32> to vector<1xf32>
    %77 = vector.shape_cast %76 : vector<1xf32> to vector<1x1xf32>
    %78 = tpu.iota {dimensions = array<i32: 1>} : vector<8x128xi32>
    %79 = tpu.iota {dimensions = array<i32: 0>} : vector<8x128xi32>
    %c0_i32 = arith.constant 0 : i32
    %80 = vector.broadcast %c0_i32 : i32 to vector<8x128xi32>
    %81 = arith.cmpi eq, %79, %80 : vector<8x128xi32>
    %c0_i32_30 = arith.constant 0 : i32
    %82 = vector.broadcast %c0_i32_30 : i32 to vector<8x128xi32>
    %83 = arith.cmpi eq, %78, %82 : vector<8x128xi32>
    %84 = arith.andi %81, %83 : vector<8x128xi1>
    %c0_i32_31 = arith.constant 0 : i32
    %85 = vector.broadcast %c0_i32_31 : i32 to vector<8x128xi32>
    %86 = arith.cmpi eq, %79, %85 : vector<8x128xi32>
    %c1_i32 = arith.constant 1 : i32
    %87 = vector.broadcast %c1_i32 : i32 to vector<8x128xi32>
    %88 = arith.cmpi eq, %78, %87 : vector<8x128xi32>
    %89 = arith.andi %86, %88 : vector<8x128xi1>
    %c0_i32_32 = arith.constant 0 : i32
    %90 = vector.broadcast %c0_i32_32 : i32 to vector<8x128xi32>
    %91 = arith.cmpi eq, %79, %90 : vector<8x128xi32>
    %c2_i32 = arith.constant 2 : i32
    %92 = vector.broadcast %c2_i32 : i32 to vector<8x128xi32>
    %93 = arith.cmpi eq, %78, %92 : vector<8x128xi32>
    %94 = arith.andi %91, %93 : vector<8x128xi1>
    %c0_i32_33 = arith.constant 0 : i32
    %95 = vector.broadcast %c0_i32_33 : i32 to vector<8x128xi32>
    %96 = arith.cmpi eq, %79, %95 : vector<8x128xi32>
    %c3_i32 = arith.constant 3 : i32
    %97 = vector.broadcast %c3_i32 : i32 to vector<8x128xi32>
    %98 = arith.cmpi eq, %78, %97 : vector<8x128xi32>
    %99 = arith.andi %96, %98 : vector<8x128xi1>
    %cst_34 = arith.constant 0.000000e+00 : f32
    %100 = vector.shape_cast %77 : vector<1x1xf32> to vector<1x1xf32>
    %101 = vector.broadcast %100 : vector<1x1xf32> to vector<8x128xf32>
    %102 = vector.broadcast %cst_34 : f32 to vector<8x128xf32>
    %103 = arith.select %99, %101, %102 : vector<8x128xi1>, vector<8x128xf32>
    %104 = vector.shape_cast %75 : vector<1x1xf32> to vector<1x1xf32>
    %105 = vector.broadcast %104 : vector<1x1xf32> to vector<8x128xf32>
    %106 = arith.select %94, %105, %103 : vector<8x128xi1>, vector<8x128xf32>
    %107 = vector.shape_cast %72 : vector<1x1xf32> to vector<1x1xf32>
    %108 = vector.broadcast %107 : vector<1x1xf32> to vector<8x128xf32>
    %109 = arith.select %89, %108, %106 : vector<8x128xi1>, vector<8x128xf32>
    %110 = vector.shape_cast %69 : vector<1x1xf32> to vector<1x1xf32>
    %111 = vector.broadcast %110 : vector<1x1xf32> to vector<8x128xf32>
    %112 = arith.select %84, %111, %109 : vector<8x128xi1>, vector<8x128xf32>
    %c0_35 = arith.constant 0 : index
    %c0_36 = arith.constant 0 : index
    %c0_37 = arith.constant 0 : index
    %113 = vector.load %arg4[%c0_35, %c0_36, %c0_37] : memref<1x8x128xf32, #tpu.memory_space<vmem>>, vector<1x8x128xf32>
    %114 = vector.shape_cast %113 : vector<1x8x128xf32> to vector<8x128xf32>
    %115 = vector.shape_cast %112 : vector<8x128xf32> to vector<1x8x128xf32>
    tpu.vector_store %arg4[%c0_35, %c0_36, %c0_37], %115 {strides = array<i32>} : memref<1x8x128xf32, #tpu.memory_space<vmem>>, vector<1x8x128xf32>,
    return
  }
  func.func @transform_0(%arg0: i32) -> (i32, i32) {
    %c0_i32 = arith.constant 0 : i32
    %c0_i32_0 = arith.constant 0 : i32
    return %arg0, %c0_i32 : i32, i32
  }
  func.func @transform_1(%arg0: i32) -> (i32, i32) {
    %c0_i32 = arith.constant 0 : i32
    %c0_i32_0 = arith.constant 0 : i32
    return %arg0, %c0_i32 : i32, i32
  }
  func.func @transform_2(%arg0: i32) -> (i32, i32) {
    %c0_i32 = arith.constant 0 : i32
    %c0_i32_0 = arith.constant 0 : i32
    return %arg0, %c0_i32 : i32, i32
  }
  func.func @transform_3(%arg0: i32) -> (i32, i32, i32) {
    %c0_i32 = arith.constant 0 : i32
    %c0_i32_0 = arith.constant 0 : i32
    %c0_i32_1 = arith.constant 0 : i32
    return %arg0, %c0_i32, %c0_i32_0 : i32, i32, i32
  }
}

</mosaic_0001>

<llo_original>
// kernel: pos_dice_loss.1
$region0: #{pos_dice_loss.1}
  #allocation0 [shape = 'u32[]', space=smem, size = 0x4, offset = 0x4, fixed_abs, tag = 'smem constant byte address 0x4 - core index']
  #allocation1 [shape = 'u32[144,128]{1,0:T(1,128)}', space=vmem, size = 0x12000, scoped, tag = 'internal scratch']
  %s0 = inlined_call_operand.vmem [shape: f32[8,256], index: 0, kind: input, shape index: {}]
  %s1 = inlined_call_operand.vmem [shape: f32[8,256], index: 1, kind: input, shape index: {}]
  %s2 = inlined_call_operand.vmem [shape: f32[8,1], index: 2, kind: input, shape index: {}]
  %s3 = inlined_call_operand.vmem [shape: f32[1,8,128], index: 3, kind: output, shape index: {}]
  %s4 = sld [smem:[#allocation0]]
  $region22: #{pos_dice_loss.1} parent=0
    _
  %s6 = ssub.s32 1, %s4
  %s7 = scalar_select 0, %s6, %s4
  // Predicated region
  $region2: #{pos_dice_loss.1} parent=0 // pred_check
    _
  $region3: #{pos_dice_loss.1} parent=0 // pred_check_branch
    %9 = sbr.rel (0) target = $region5
  $region4: #{pos_dice_loss.1} parent=0 // pred_region
    _
  $region5: #{pos_dice_loss.1} parent=0 // pred_fallthru
    _
  // Predicated region
  $region6: #{pos_dice_loss.1} parent=0 // pred_check
    _
  $region7: #{pos_dice_loss.1} parent=0 // pred_check_branch
    %11 = sbr.rel (0) target = $region9
  $region8: #{pos_dice_loss.1} parent=0 // pred_region
    _
  $region9: #{pos_dice_loss.1} parent=0 // pred_fallthru
    _
  // Predicated region
  $region10: #{pos_dice_loss.1} parent=0 // pred_check
    _
  $region11: #{pos_dice_loss.1} parent=0 // pred_check_branch
    %13 = sbr.rel (0) target = $region13
  $region12: #{pos_dice_loss.1} parent=0 // pred_region
    _
  $region13: #{pos_dice_loss.1} parent=0 // pred_fallthru
    _
  %v14 = vld [vmem:[%s0] sm:$0xff]
  %v15 = vld [vmem:[%s0 + $0x8] sm:$0xff]
  %v16 = vld [vmem:[%s1] sm:$0xff]
  %v17 = vld [vmem:[%s1 + $0x8] sm:$0xff]
  %v18 = vld [vmem:[%s2] sm:$0xff]
  %v19 = vmax.f32 %v14, %v15
  %20 = vmax.xlane.f32.xlu0 %v19
  %v21 = vpop.xlane.xlu0 %20
  %v22 = vmax.f32 %v16, %v17
  %23 = vmax.xlane.f32.xlu0 %v22
  %v24 = vpop.xlane.xlu0 %23
  %vm25 = vcmp.ge.f32.partialorder %v14, %v21
  %vm26 = vcmp.ge.f32.partialorder %v15, %v21
  %vm27 = vcmp.ge.f32.partialorder %v16, %v24
  %vm28 = vcmp.ge.f32.partialorder %v17, %v24
  %vm29 = vmand %vm25, %vm27
  %vm30 = vmand %vm26, %vm28
  %v31 = vsel %vm29, 1, 0
  %v32 = vsel %vm30, 1, 0
  %v33 = vcvt.s32.f32 %v31
  %v34 = vcvt.s32.f32 %v32
  %v35 = vmax.f32 %v33, %v34
  %36 = vmax.xlane.f32.xlu0 %v35
  %v37 = vpop.xlane.xlu0 %36
  %v38 = vmul.f32 %v14, 0.5
  %v39 = vmul.f32 %v15, 0.5
  %v40 = vtanh.pop %v38
  %v41 = vtanh.pop %v39
  %v42 = vmul.f32 %v40, 0.5
  %v43 = vmul.f32 %v41, 0.5
  %v44 = vadd.f32 %v42, 0.5
  %v45 = vadd.f32 %v43, 0.5
  %vm46 = vcmp.ge.f32.partialorder %v14, 0.0
  %vm47 = vcmp.ge.f32.partialorder %v15, 0.0
  %v48 = vsub.f32 1.0, %v44
  %v49 = vsub.f32 1.0, %v45
  %v50 = vsel %vm46, %v44, %v48
  %v51 = vsel %vm47, %v45, %v49
  %v52 = vlog2.pop %v50
  %v53 = vmul.f32 %v52, 0.6931472
  %v54 = vlog2.pop %v51
  %v55 = vmul.f32 %v54, 0.6931472
  %v56 = vsub.f32 0.0, %v53
  %v57 = vsub.f32 0.0, %v55
  %v58 = vmax.f32 %v14, 0.0
  %v59 = vmax.f32 %v15, 0.0
  %v60 = vmul.f32 %v14, %v16
  %v61 = vmul.f32 %v15, %v17
  %v62 = vsub.f32 %v58, %v60
  %v63 = vsub.f32 %v59, %v61
  %v64 = vadd.f32 %v62, %v56
  %v65 = vadd.f32 %v63, %v57
  %v66 = vadd.f32 %v64, %v65
  %67 = vadd.xlane.f32.xlu0 %v66
  %v68 = vpop.xlane.xlu0 %67
  %v69 = vmul.f32 %v68, 0.00390625
  %v70 = vmul.f32 %v44, %v16
  %v71 = vmul.f32 %v45, %v17
  %v72 = vadd.f32 %v70, %v71
  %73 = vadd.xlane.f32.xlu0 %v72
  %v74 = vpop.xlane.xlu0 %73
  %v75 = vadd.f32 %v44, %v16
  %v76 = vadd.f32 %v45, %v17
  %v77 = vadd.f32 %v75, %v76
  %78 = vadd.xlane.f32.xlu0 %v77
  %v79 = vpop.xlane.xlu0 %78
  %v80 = vmul.f32 %v74, 2.0
  %v81 = vadd.f32 %v80, 1.0
  %v82 = vadd.f32 %v79, 1.0
  %v83 = vrcp.pop %v82
  %v84 = vmul.f32 %v81, %v83
  %v85 = vsub.f32 1.0, %v84
  %v86 = vlaneseq
  %v87 = vshrl.u32 %v86, 7
  %s88 = smul.u32 0, 8
  %v89 = vstv %s88
  %v90 = vadd.s32 %v87, %v89
  %vm91 = vcmp.lt.s32.totalorder %v90, 8
  %v92 = vsel %vm91, %v18, 0.0
  %v93 = vsel %vm91, %v69, 0.0
  %v94 = vsel %vm91, %v85, 0.0
  %v95 = vmul.f32 %v92, %v93
  %vm96 = vcmask 7168
  %v97 = vsel %vm96, %v95, 0.0
  %v98 = vrot.slane %v97, 4
  %v99 = vadd.f32 %v97, %v98
  %v100 = vrot.slane %v99, 2
  %v101 = vadd.f32 %v99, %v100
  %v102 = vrot.slane %v101, 1
  %v103 = vadd.f32 %v101, %v102
  %v104 = vmul.f32 %v92, %v94
  %v105 = vsel %vm96, %v104, 0.0
  %v106 = vrot.slane %v105, 4
  %v107 = vadd.f32 %v105, %v106
  %v108 = vrot.slane %v107, 2
  %v109 = vadd.f32 %v107, %v108
  %v110 = vrot.slane %v109, 1
  %v111 = vadd.f32 %v109, %v110
  %v112 = vmul.f32 %v92, %v37
  %v113 = vsel %vm96, %v112, 0.0
  %v114 = vrot.slane %v113, 4
  %v115 = vadd.f32 %v113, %v114
  %v116 = vrot.slane %v115, 2
  %v117 = vadd.f32 %v115, %v116
  %v118 = vrot.slane %v117, 1
  %v119 = vadd.f32 %v117, %v118
  %v120 = vsel %vm96, %v92, 0.0
  %v121 = vrot.slane %v120, 4
  %v122 = vadd.f32 %v120, %v121
  %v123 = vrot.slane %v122, 2
  %v124 = vadd.f32 %v122, %v123
  %v125 = vrot.slane %v124, 1
  %v126 = vadd.f32 %v124, %v125
  %v127 = vlaneseq
  %v128 = vand.u32 %v127, 127
  %vm129 = vcmp.eq.s32.totalorder %v87, 0
  %vm130 = vcmp.eq.s32.totalorder %v128, 0
  %vm131 = vmand %vm129, %vm130
  %vm132 = vcmp.eq.s32.totalorder %v128, 1
  %vm133 = vmand %vm129, %vm132
  %vm134 = vcmp.eq.s32.totalorder %v128, 2
  %vm135 = vmand %vm129, %vm134
  %vm136 = vcmp.eq.s32.totalorder %v128, 3
  %vm137 = vmand %vm129, %vm136
  %139 = vset.pattern.permute.xlu0 0
  %140 = vperm.xlu0 %139, %v126
  %v141 = vpop.permute.xlu0 %140
  %v143 = vsel %vm137, %v141, 0.0
  %145 = vset.pattern.permute.xlu0 0
  %146 = vperm.xlu0 %145, %v119
  %v147 = vpop.permute.xlu0 %146
  %v149 = vsel %vm135, %v147, %v143
  %151 = vset.pattern.permute.xlu0 0
  %152 = vperm.xlu0 %151, %v111
  %v153 = vpop.permute.xlu0 %152
  %v155 = vsel %vm133, %v153, %v149
  %157 = vset.pattern.permute.xlu0 0
  %158 = vperm.xlu0 %157, %v103
  %v159 = vpop.permute.xlu0 %158
  %v161 = vsel %vm131, %v159, %v155
  %162 = vst [vmem:[%s3] sm:$0xff] %v161
  // Predicated region
  $region14: #{pos_dice_loss.1} parent=0 // pred_check
    _
  $region15: #{pos_dice_loss.1} parent=0 // pred_check_branch
    %164 = sbr.rel (0) target = $region17
  $region16: #{pos_dice_loss.1} parent=0 // pred_region
    _
  $region17: #{pos_dice_loss.1} parent=0 // pred_fallthru
    _
  // Predicated region
  $region18: #{pos_dice_loss.1} parent=0 // pred_check
    _
  $region19: #{pos_dice_loss.1} parent=0 // pred_check_branch
    %166 = sbr.rel (0) target = $region21
  $region20: #{pos_dice_loss.1} parent=0 // pred_region
    _
  $region21: #{pos_dice_loss.1} parent=0 // pred_fallthru
    _

</llo_original>
